<compile_context>
chip_gen: v6e
topology: v6e:2x2x1
jax: 0.10.0
libtpu: 0.0.40
codegen_flags: <defaults>
</compile_context>

<pallas_src>
import jax
import jax.numpy as jnp
from jax.experimental import pallas as pl
from jax.experimental.pallas import tpu as pltpu

_LANE = 128
_SUBLANE_F32 = 8
_SUBLANE_BF16 = 16
_MiB = 1024 * 1024


def _round_up(x, m):
    return (x + m - 1) // m * m


# -------------------- Pallas kernel (the stateless model's forward) --------

def _mlp_kernel(x_ref, w1_ref, b1_ref, w2_ref, b2_ref, o_ref):
    # Layer "0": hidden = relu(x @ W1 + b1).
    # x arrives in its source dtype; the MXU cast happens here (hides under
    # the matmul instead of costing a separate XLA op + HBM round trip).
    x = x_ref[...].astype(w1_ref.dtype)
    h = jnp.dot(x, w1_ref[...], preferred_element_type=jnp.float32)
    h = jnp.maximum(h + b1_ref[...], 0.0)            # f32 bias + ReLU (VPU)
    # Layer "2": out = hidden @ W2 + b2 (cast to bf16 only for the MXU,
    # accumulate in f32, cast once at the store).
    o = jnp.dot(h.astype(w2_ref.dtype), w2_ref[...],
                preferred_element_type=jnp.float32)
    o_ref[...] = (o + b2_ref[...]).astype(o_ref.dtype)


def _mlp_pallas(x, w1_t, b1, w2_t, b2, *, out_dtype, tile_b, tile_n,
                vmem_limit_bytes):
    B, D_in = x.shape
    H_pad = w1_t.shape[1]
    N_pad = w2_t.shape[1]
    grid = (pl.cdiv(B, tile_b), pl.cdiv(N_pad, tile_n))

    # First layer is recomputed once per N block (only matters when tile_n <
    # N_pad, i.e. very wide models where weight residency is VMEM-capped).
    flops = int(2 * B * (D_in * H_pad * grid[1] + H_pad * N_pad))
    bytes_accessed = int(
        x.size * x.dtype.itemsize
        + w1_t.size * w1_t.dtype.itemsize
        + b1.size * b1.dtype.itemsize
        + w2_t.size * w2_t.dtype.itemsize
        + b2.size * b2.dtype.itemsize
        + B * N_pad * jnp.dtype(out_dtype).itemsize)

    return pl.pallas_call(
        _mlp_kernel,
        out_shape=jax.ShapeDtypeStruct((B, N_pad), out_dtype),
        grid=grid,
        in_specs=[
            # batch tile of x: pipelined over the batch grid axis
            pl.BlockSpec((tile_b, D_in), lambda i, j: (i, 0)),
            # weights / biases: constant (or N-blocked) index_maps; unchanged
            # blocks are not re-DMA'd between grid steps.
            pl.BlockSpec((D_in, H_pad), lambda i, j: (0, 0)),
            pl.BlockSpec((1, H_pad), lambda i, j: (0, 0)),
            pl.BlockSpec((H_pad, tile_n), lambda i, j: (0, j)),
            pl.BlockSpec((1, tile_n), lambda i, j: (0, j)),
        ],
        out_specs=pl.BlockSpec((tile_b, tile_n), lambda i, j: (i, j)),
        compiler_params=pltpu.CompilerParams(
            dimension_semantics=("parallel", "parallel"),
            vmem_limit_bytes=vmem_limit_bytes),
        cost_estimate=pl.CostEstimate(
            flops=flops, transcendentals=0, bytes_accessed=bytes_accessed),
    )(x, w1_t, b1, w2_t, b2)


# -------------------- FunctionalModule analogue ----------------------------

class FunctionalModule:
    """JAX analogue of torchrl's FunctionalModule for a stateless
    nn.Sequential(Linear(D_in, H), ReLU, Linear(H, D_out)).

    __call__(params, x) "swaps" params into the stateless model and runs the
    fused Pallas MLP.  `params` may be either the raw extract_weights layout
    ({"0": {"weight","bias"}, "2": {...}} with PyTorch [out, in] weights) or
    the result of prepare_params() (pre-transposed / padded / bf16 — use this
    to hoist glue out of the per-call hot path)."""

    def __init__(self, in_features, hidden, out_features,
                 compute_dtype=jnp.bfloat16, tile_b=512):
        self.in_features = in_features
        self.hidden = hidden
        self.out_features = out_features
        self.compute_dtype = jnp.dtype(compute_dtype)
        self.tile_b = tile_b

    def prepare_params(self, params):
        """One-time glue: transpose [out,in]->[in,out], cast MXU operands to
        the compute dtype, keep biases f32, zero-pad H and D_out to 128-lane
        multiples so all vreg traffic and the output store are lane-dense.
        (Padding is exact: padded hidden columns are relu(0+0)=0 and
        contribute nothing to the second matmul.)"""
        # Note: on v6e/v7x (2x256 MXU) rounding to 256 avoids partially
        # filled systolic passes when H/D_out are just above a 128 multiple;
        # 128 is kept here as the portable default (optimal on v5e).
        h_pad = _round_up(self.hidden, _LANE)
        n_pad = _round_up(self.out_features, _LANE)

        w1 = params["0"]["weight"]            # [H, D_in]
        b1 = params["0"]["bias"]              # [H]
        w2 = params["2"]["weight"]            # [D_out, H]
        b2 = params["2"]["bias"]              # [D_out]

        w1_t = jnp.pad(jnp.transpose(w1).astype(self.compute_dtype),
                       ((0, 0), (0, h_pad - self.hidden)))            # [D_in, H_pad]
        b1_2d = jnp.pad(b1.reshape(1, -1).astype(jnp.float32),
                        ((0, 0), (0, h_pad - self.hidden)))           # [1, H_pad]
        w2_t = jnp.pad(jnp.transpose(w2).astype(self.compute_dtype),
                       ((0, h_pad - self.hidden),
                        (0, n_pad - self.out_features)))              # [H_pad, N_pad]
        b2_2d = jnp.pad(b2.reshape(1, -1).astype(jnp.float32),
                        ((0, 0), (0, n_pad - self.out_features)))     # [1, N_pad]
        return {"w1_t": w1_t, "b1": b1_2d, "w2_t": w2_t, "b2": b2_2d}

    def __call__(self, params, x):
        if "w1_t" not in params:
            # TODO(synk): raw-layout fallback re-runs transpose/pad/cast every
            # forward; call prepare_params() once and reuse for the hot path.
            params = self.prepare_params(params)

        w1_t, b1 = params["w1_t"], params["b1"]
        w2_t, b2 = params["w2_t"], params["b2"]
        B, D_in = x.shape
        H_pad = w1_t.shape[1]
        N_pad = w2_t.shape[1]
        cdt_bytes = self.compute_dtype.itemsize
        out_bytes = jnp.dtype(x.dtype).itemsize

        # --- batch tile: big (default 512), 16-row multiple for bf16 sublane
        # packing, and capped at ceil(B/2) so the "parallel" axis has >= 2
        # steps for the two v7x TensorCores.
        min_tile = (_SUBLANE_BF16 if self.compute_dtype == jnp.dtype(jnp.bfloat16)
                    else _SUBLANE_F32)
        tile_b = max(min_tile, min(self.tile_b,
                                   _round_up(pl.cdiv(B, 2), min_tile)))

        # --- N tile: keep the whole padded output width resident unless the
        # (double-buffered) weights would blow the VMEM budget (v7x: 64 MiB
        # physical); then block W2/b2/out over output columns.
        def weight_bytes(tn):
            return (2 * (D_in * H_pad + H_pad * tn) * cdt_bytes
                    + 2 * (H_pad + tn) * 4)

        tile_n = N_pad
        while weight_bytes(tile_n) > 16 * _MiB and tile_n > _LANE:
            tile_n = _round_up(max(_LANE, tile_n // 2), _LANE)

        # --- cap tile_b against the per-step activation footprint.
        def act_bytes(tb):
            return (2 * tb * D_in * x.dtype.itemsize      # x double buffer
                    + 2 * tb * tile_n * out_bytes         # out double buffer
                    + tb * H_pad * 4                      # f32 hidden temp
                    + tb * tile_n * 4)                    # f32 out temp
        while act_bytes(tile_b) > 24 * _MiB and tile_b > min_tile:
            tile_b = max(min_tile, tile_b // 2)

        vmem_limit = int(1.5 * (act_bytes(tile_b) + weight_bytes(tile_n)))
        vmem_limit = max(16 * _MiB, min(vmem_limit + 4 * _MiB, 48 * _MiB))

        out = _mlp_pallas(x, w1_t, b1, w2_t, b2,
                          out_dtype=x.dtype, tile_b=tile_b, tile_n=tile_n,
                          vmem_limit_bytes=vmem_limit)
        if N_pad != self.out_features:      # slice only when padding exists
            out = out[:, :self.out_features]
        return out


def extract_weights(key, in_features, hidden, out_features, dtype=jnp.float32):
    """Deterministic stand-in for torchrl's extract_weights: builds the nested
    params dict with the same shapes nn.Sequential would produce."""
    k1, k2, k3, k4 = jax.random.split(key, 4)
    s1 = 1.0 / jnp.sqrt(in_features)
    s2 = 1.0 / jnp.sqrt(hidden)
    return {
        "0": {
            "weight": jax.random.uniform(k1, (hidden, in_features), dtype, -s1, s1),
            "bias":   jax.random.uniform(k2, (hidden,), dtype, -s1, s1),
        },
        "2": {
            "weight": jax.random.uniform(k3, (out_features, hidden), dtype, -s2, s2),
            "bias":   jax.random.uniform(k4, (out_features,), dtype, -s2, s2),
        },
    }


# -------------------- reference (pure JAX, f32) -----------------------------

def _reference(params, x):
    h = x @ params["0"]["weight"].T + params["0"]["bias"]
    h = jnp.maximum(h, 0.0)
    return h @ params["2"]["weight"].T + params["2"]["bias"]


if __name__ == "__main__":
    # B=48 with tile_b=32 exercises a 2-step parallel grid + a ragged last
    # batch block (masked by Pallas, not by wrapper-side padding).
    B, D_IN, H, D_OUT = 48, 32, 64, 16

    key = jax.random.PRNGKey(0)
    kx, kp = jax.random.split(key)
    x = jax.random.normal(kx, (B, D_IN), jnp.float32)
    params = extract_weights(kp, D_IN, H, D_OUT)

    fmodule = FunctionalModule(D_IN, H, D_OUT)
    prepared = fmodule.prepare_params(params)   # hoist glue out of the hot path

    out = fmodule(prepared, x)
    out = jax.block_until_ready(out)

    ref = _reference(params, x)
    assert out.shape == (B, D_OUT), out.shape
    # bf16 MXU operands (f32 accumulate) -> loosened tolerance vs. f32 reference.
    assert jnp.allclose(out, ref, atol=3e-2, rtol=3e-2), \
        float(jnp.max(jnp.abs(out - ref)))

    print("KERNEL_OK")
</pallas_src>

<mosaic_0001>
module attributes {stable_mosaic.version = 11 : i64} {
  func.func @_mlp_kernel(%arg0: i32, %arg1: i32, %arg2: memref<32x32xf32, #tpu.memory_space<vmem>>, %arg3: memref<32x128xbf16, #tpu.memory_space<vmem>>, %arg4: memref<1x128xf32, #tpu.memory_space<vmem>>, %arg5: memref<128x128xbf16, #tpu.memory_space<vmem>>, %arg6: memref<1x128xf32, #tpu.memory_space<vmem>>, %arg7: memref<32x128xf32, #tpu.memory_space<vmem>>) attributes {dimension_semantics = [#tpu.dimension_semantics<parallel>, #tpu.dimension_semantics<parallel>], iteration_bounds = array<i64: 2, 1>, scalar_prefetch = 0 : i64, scratch_operands = 0 : i64, tpu.core_type = #tpu.core_type<tc>, window_params = [{transform_indices = @transform_0, window_bounds = array<i64: 32, 32>}, {pipeline_mode = #tpu.pipeline_mode<synchronous>, transform_indices = @transform_1, window_bounds = array<i64: 32, 128>}, {pipeline_mode = #tpu.pipeline_mode<synchronous>, transform_indices = @transform_2, window_bounds = array<i64: 1, 128>}, {transform_indices = @transform_3, window_bounds = array<i64: 128, 128>}, {transform_indices = @transform_4, window_bounds = array<i64: 1, 128>}, {transform_indices = @transform_5, window_bounds = array<i64: 32, 128>}]} {
    %c0 = arith.constant 0 : index
    %c0_0 = arith.constant 0 : index
    %0 = vector.load %arg2[%c0, %c0_0] : memref<32x32xf32, #tpu.memory_space<vmem>>, vector<32x32xf32>
    %1 = arith.truncf %0 : vector<32x32xf32> to vector<32x32xbf16>
    %c0_1 = arith.constant 0 : index
    %c0_2 = arith.constant 0 : index
    %2 = vector.load %arg3[%c0_1, %c0_2] : memref<32x128xbf16, #tpu.memory_space<vmem>>, vector<32x128xbf16>
    %cst = arith.constant dense<0.000000e+00> : vector<32x128xf32>
    %3 = tpu.matmul %1, %2, %cst {dimension_numbers = #tpu.dot_dimension_numbers<[1], [0], [0], [1], [0, 0, 1, 1], [], []>} : vector<32x32xbf16>, vector<32x128xbf16>, vector<32x128xf32> -> vector<32x128xf32>
    %c0_3 = arith.constant 0 : index
    %c0_4 = arith.constant 0 : index
    %4 = vector.load %arg4[%c0_3, %c0_4] : memref<1x128xf32, #tpu.memory_space<vmem>>, vector<1x128xf32>
    %5 = vector.broadcast %4 : vector<1x128xf32> to vector<32x128xf32>
    %6 = arith.addf %3, %5 : vector<32x128xf32>
    %cst_5 = arith.constant 0.000000e+00 : f32
    %7 = vector.broadcast %cst_5 : f32 to vector<32x128xf32>
    %8 = arith.maximumf %6, %7 : vector<32x128xf32>
    %9 = arith.truncf %8 : vector<32x128xf32> to vector<32x128xbf16>
    %c0_6 = arith.constant 0 : index
    %c0_7 = arith.constant 0 : index
    %10 = vector.load %arg5[%c0_6, %c0_7] : memref<128x128xbf16, #tpu.memory_space<vmem>>, vector<128x128xbf16>
    %cst_8 = arith.constant dense<0.000000e+00> : vector<32x128xf32>
    %11 = tpu.matmul %9, %10, %cst_8 {dimension_numbers = #tpu.dot_dimension_numbers<[1], [0], [0], [1], [0, 0, 1, 1], [], []>} : vector<32x128xbf16>, vector<128x128xbf16>, vector<32x128xf32> -> vector<32x128xf32>
    %c0_9 = arith.constant 0 : index
    %c0_10 = arith.constant 0 : index
    %12 = vector.load %arg6[%c0_9, %c0_10] : memref<1x128xf32, #tpu.memory_space<vmem>>, vector<1x128xf32>
    %13 = vector.broadcast %12 : vector<1x128xf32> to vector<32x128xf32>
    %14 = arith.addf %11, %13 : vector<32x128xf32>
    %c0_11 = arith.constant 0 : index
    %c0_12 = arith.constant 0 : index
    %15 = vector.load %arg7[%c0_11, %c0_12] : memref<32x128xf32, #tpu.memory_space<vmem>>, vector<32x128xf32>
    tpu.vector_store %arg7[%c0_11, %c0_12], %14 {strides = array<i32>} : memref<32x128xf32, #tpu.memory_space<vmem>>, vector<32x128xf32>,
    return
  }
  func.func @transform_0(%arg0: i32, %arg1: i32) -> (i32, i32) {
    %c0_i32 = arith.constant 0 : i32
    %c0_i32_0 = arith.constant 0 : i32
    return %arg0, %c0_i32 : i32, i32
  }
  func.func @transform_1(%arg0: i32, %arg1: i32) -> (i32, i32) {
    %c0_i32 = arith.constant 0 : i32
    %c0_i32_0 = arith.constant 0 : i32
    %c0_i32_1 = arith.constant 0 : i32
    return %c0_i32, %c0_i32_0 : i32, i32
  }
  func.func @transform_2(%arg0: i32, %arg1: i32) -> (i32, i32) {
    %c0_i32 = arith.constant 0 : i32
    %c0_i32_0 = arith.constant 0 : i32
    %c0_i32_1 = arith.constant 0 : i32
    return %c0_i32, %c0_i32_0 : i32, i32
  }
  func.func @transform_3(%arg0: i32, %arg1: i32) -> (i32, i32) {
    %c0_i32 = arith.constant 0 : i32
    %c0_i32_0 = arith.constant 0 : i32
    return %c0_i32, %arg1 : i32, i32
  }
  func.func @transform_4(%arg0: i32, %arg1: i32) -> (i32, i32) {
    %c0_i32 = arith.constant 0 : i32
    %c0_i32_0 = arith.constant 0 : i32
    return %c0_i32, %arg1 : i32, i32
  }
  func.func @transform_5(%arg0: i32, %arg1: i32) -> (i32, i32) {
    %c0_i32 = arith.constant 0 : i32
    return %arg0, %arg1 : i32, i32
  }
}

</mosaic_0001>

<llo_original>
// kernel: tpu_custom_call.1
$region0: #{tpu_custom_call.1}
  #allocation0 [shape = 'u32[]', space=smem, size = 0x4, offset = 0x4, fixed_abs, tag = 'smem constant byte address 0x4 - core index']
  #allocation1 [shape = 'u32[144,128]{1,0:T(1,128)}', space=vmem, size = 0x12000, scoped, tag = 'internal scratch']
  %s0 = inlined_call_operand.vmem [shape: f32[48,32], index: 0, kind: input, shape index: {}]
  %s1 = inlined_call_operand.vmem [shape: bf16[32,128], index: 1, kind: input, shape index: {}]
  %s2 = inlined_call_operand.vmem [shape: f32[1,128], index: 2, kind: input, shape index: {}]
  %s3 = inlined_call_operand.vmem [shape: bf16[128,128], index: 3, kind: input, shape index: {}]
  %s4 = inlined_call_operand.vmem [shape: f32[1,128], index: 4, kind: input, shape index: {}]
  %s5 = inlined_call_operand.hbm [shape: f32[48,128], index: 5, kind: output, shape index: {}]
  %s6 = sld [smem:[#allocation0]]
  $region53: #{tpu_custom_call.1} parent=0
    _
  %s8 = ssub.s32 1, %s6
  %s9 = scalar_select 0, %s8, %s6
  $region1: #{tpu_custom_call.1} parent=0
    #allocation2 [shape = 'u8[32768]{0}', space=vmem, size = 0x8000, scoped, tag = 'output window, operand 0']
    #allocation3 [shape = 's32[2]{0}', space=sflag, size = 0x8, scoped, tag = 'scoped memory for tpu_custom_call.1']
    %10 = vsyncpa [#allocation3], 0
    %s11 = scalar_lea.sflag [#allocation3], 1
    %12 = vsyncpa %s11, 0
    loop: start=0, step=1, limit=4
    $region2: #{tpu_custom_call.1} parent=1 // loop_pre_header
      _
    $region3: #{tpu_custom_call.1} parent=1 // loop_header
      %s14 = sphi 0, %s18
      %p15 = scmp.ge.s32.totalorder %s14, 4
      %s21 = sphi 0, %s33
      %s22 = sphi 0, %s29
      %s23 = sphi 0, %s21
      %s24 = sphi 0, %s22
      %s25 = sphi 0, %s23
      %s26 = sphi 0, %s24
      %s36 = sphi 0, %s38
      %s39 = sphi 0, %s36
      %s40 = sphi 0, %s39
      %s56 = sphi 0, %s40
      %s60 = sphi 0, %s60
      %s62 = sphi 0, %s60
      %s63 = sphi 0, %s62
      %s77 = sphi 0, %s63
      %s81 = sphi 0, %s81
      %s83 = sphi 0, %s81
      %s84 = sphi 0, %s83
      %s98 = sphi 0, %s84
      %s104 = sphi 0, %s106
      %s107 = sphi 0, %s104
      %s108 = sphi 0, %s107
      %s124 = sphi 0, %s108
      %s130 = sphi 0, %s132
      %s133 = sphi 0, %s130
      %s134 = sphi 0, %s133
      %s150 = sphi 0, %s134
      %s158 = sphi 0, %s160
      %s161 = sphi 0, %s158
      %s162 = sphi 0, %s161
      %s178 = sphi 0, %s162
    $region4: #{tpu_custom_call.1} parent=1 // loop_header_branch
      %17 = sbr.rel (%p15) target = $region8
    $region5: #{tpu_custom_call.1} parent=1 // loop_body
      %s19 = ssub.s32 %s14, 1
      %s20 = ssub.s32 %s14, 2
      %s27 = sadd.s32 1, %s22
      %p28 = scmp.ge.s32.totalorder %s27, 1
      %s29 = scalar_select %p28, 0, %s27
      %s30 = sadd.s32 1, %s21
      %s31 = scalar_select %p28, %s30, %s21
      %p32 = scmp.ge.s32.totalorder %s31, 2
      %s33 = scalar_select %p32, 0, %s31
      %s34 = ssub.s32 %s21, %s33
      %p35 = scmp.eq.s32.totalorder %s34, 0
      %s37 = sadd.s32 %s36, 1
      %s38 = scalar_select %p35, %s36, %s37
      %p41 = pneg %p35
      %p42 = scmp.eq.s32.totalorder %s14, 1
      %p43 = por %p41, %p42
      %p44 = scmp.ne.s32.totalorder %s36, %s39
      %p45 = scmp.eq.s32.totalorder %s14, 0
      %p46 = por %p44, %p45
      %p47 = scmp.ne.s32.totalorder %s36, %s39
      %p48 = scmp.eq.s32.totalorder %s19, 1
      %p49 = por %p47, %p48
      %p50 = scmp.ne.s32.totalorder %s39, %s40
      %p51 = scmp.eq.s32.totalorder %s19, 0
      %p52 = por %p50, %p51
      %p53 = scmp.ne.s32.totalorder %s39, %s40
      %p54 = scmp.eq.s32.totalorder %s20, 1
      %p55 = por %p53, %p54
      %p57 = scmp.ne.s32.totalorder %s40, %s56
      %p58 = scmp.eq.s32.totalorder %s20, 0
      %p59 = por %p57, %p58
      %s61 = sadd.s32 %s60, 1
      %p64 = scmp.eq.s32.totalorder %s14, 1
      %p65 = scmp.ne.s32.totalorder %s60, %s62
      %p66 = scmp.eq.s32.totalorder %s14, 0
      %p67 = por %p65, %p66
      %p68 = scmp.ne.s32.totalorder %s60, %s62
      %p69 = scmp.eq.s32.totalorder %s19, 1
      %p70 = por %p68, %p69
      %p71 = scmp.ne.s32.totalorder %s62, %s63
      %p72 = scmp.eq.s32.totalorder %s19, 0
      %p73 = por %p71, %p72
      %p74 = scmp.ne.s32.totalorder %s62, %s63
      %p75 = scmp.eq.s32.totalorder %s20, 1
      %p76 = por %p74, %p75
      %p78 = scmp.ne.s32.totalorder %s63, %s77
      %p79 = scmp.eq.s32.totalorder %s20, 0
      %p80 = por %p78, %p79
      %s82 = sadd.s32 %s81, 1
      %p85 = scmp.eq.s32.totalorder %s14, 1
      %p86 = scmp.ne.s32.totalorder %s81, %s83
      %p87 = scmp.eq.s32.totalorder %s14, 0
      %p88 = por %p86, %p87
      %p89 = scmp.ne.s32.totalorder %s81, %s83
      %p90 = scmp.eq.s32.totalorder %s19, 1
      %p91 = por %p89, %p90
      %p92 = scmp.ne.s32.totalorder %s83, %s84
      %p93 = scmp.eq.s32.totalorder %s19, 0
      %p94 = por %p92, %p93
      %p95 = scmp.ne.s32.totalorder %s83, %s84
      %p96 = scmp.eq.s32.totalorder %s20, 1
      %p97 = por %p95, %p96
      %p99 = scmp.ne.s32.totalorder %s84, %s98
      %p100 = scmp.eq.s32.totalorder %s20, 0
      %p101 = por %p99, %p100
      %s102 = ssub.s32 %s22, %s29
      %p103 = scmp.eq.s32.totalorder %s102, 0
      %s105 = sadd.s32 %s104, 1
      %s106 = scalar_select %p103, %s104, %s105
      %p109 = pneg %p103
      %p110 = scmp.eq.s32.totalorder %s14, 1
      %p111 = por %p109, %p110
      %p112 = scmp.ne.s32.totalorder %s104, %s107
      %p113 = scmp.eq.s32.totalorder %s14, 0
      %p114 = por %p112, %p113
      %p115 = scmp.ne.s32.totalorder %s104, %s107
      %p116 = scmp.eq.s32.totalorder %s19, 1
      %p117 = por %p115, %p116
      %p118 = scmp.ne.s32.totalorder %s107, %s108
      %p119 = scmp.eq.s32.totalorder %s19, 0
      %p120 = por %p118, %p119
      %p121 = scmp.ne.s32.totalorder %s107, %s108
      %p122 = scmp.eq.s32.totalorder %s20, 1
      %p123 = por %p121, %p122
      %p125 = scmp.ne.s32.totalorder %s108, %s124
      %p126 = scmp.eq.s32.totalorder %s20, 0
      %p127 = por %p125, %p126
      %s128 = ssub.s32 %s22, %s29
      %p129 = scmp.eq.s32.totalorder %s128, 0
      %s131 = sadd.s32 %s130, 1
      %s132 = scalar_select %p129, %s130, %s131
      %p135 = pneg %p129
      %p136 = scmp.eq.s32.totalorder %s14, 1
      %p137 = por %p135, %p136
      %p138 = scmp.ne.s32.totalorder %s130, %s133
      %p139 = scmp.eq.s32.totalorder %s14, 0
      %p140 = por %p138, %p139
      %p141 = scmp.ne.s32.totalorder %s130, %s133
      %p142 = scmp.eq.s32.totalorder %s19, 1
      %p143 = por %p141, %p142
      %p144 = scmp.ne.s32.totalorder %s133, %s134
      %p145 = scmp.eq.s32.totalorder %s19, 0
      %p146 = por %p144, %p145
      %p147 = scmp.ne.s32.totalorder %s133, %s134
      %p148 = scmp.eq.s32.totalorder %s20, 1
      %p149 = por %p147, %p148
      %p151 = scmp.ne.s32.totalorder %s134, %s150
      %p152 = scmp.eq.s32.totalorder %s20, 0
      %p153 = por %p151, %p152
      %s154 = ssub.s32 %s21, %s33
      %s155 = ssub.s32 %s22, %s29
      %s156 = sor.u32 %s154, %s155
      %p157 = scmp.eq.s32.totalorder %s156, 0
      %s159 = sadd.s32 %s158, 1
      %s160 = scalar_select %p157, %s158, %s159
      %p163 = pneg %p157
      %p164 = scmp.eq.s32.totalorder %s14, 1
      %p165 = por %p163, %p164
      %p166 = scmp.ne.s32.totalorder %s158, %s161
      %p167 = scmp.eq.s32.totalorder %s14, 0
      %p168 = por %p166, %p167
      %p169 = scmp.ne.s32.totalorder %s158, %s161
      %p170 = scmp.eq.s32.totalorder %s19, 1
      %p171 = por %p169, %p170
      %p172 = scmp.ne.s32.totalorder %s161, %s162
      %p173 = scmp.eq.s32.totalorder %s19, 0
      %p174 = por %p172, %p173
      %p175 = scmp.ne.s32.totalorder %s161, %s162
      %p176 = scmp.eq.s32.totalorder %s20, 1
      %p177 = por %p175, %p176
      %p179 = scmp.ne.s32.totalorder %s162, %s178
      %p180 = scmp.eq.s32.totalorder %s20, 0
      %p181 = por %p179, %p180
      %p182 = scmp.le.s32.totalorder 1, %s14
      %p183 = scmp.lt.s32.totalorder %s14, 3
      %p184 = pnand %p182, %p183
      %p185 = pneg %p184
      // Predicated region
      $region9: #{tpu_custom_call.1} parent=5 // pred_check
        _
      $region10: #{tpu_custom_call.1} parent=5 // pred_check_branch
        %187 = sbr.rel (%p184) target = $region12
      $region11: #{tpu_custom_call.1} parent=5 // pred_region
        %s188 = ssub.s32 %s14, 1
        // Predicated region
        $region13: #{tpu_custom_call.1} parent=11 // pred_check
          %p189 = pneg %p73
        $region14: #{tpu_custom_call.1} parent=11 // pred_check_branch
          %191 = sbr.rel (%p189) target = $region16
        $region15: #{tpu_custom_call.1} parent=11 // pred_region
          _
        $region16: #{tpu_custom_call.1} parent=11 // pred_fallthru
          _
        // Predicated region
        $region17: #{tpu_custom_call.1} parent=11 // pred_check
          %p192 = pneg %p94
        $region18: #{tpu_custom_call.1} parent=11 // pred_check_branch
          %194 = sbr.rel (%p192) target = $region20
        $region19: #{tpu_custom_call.1} parent=11 // pred_region
          _
        $region20: #{tpu_custom_call.1} parent=11 // pred_fallthru
          _
        // Predicated region
        $region21: #{tpu_custom_call.1} parent=11 // pred_check
          %p195 = pneg %p120
        $region22: #{tpu_custom_call.1} parent=11 // pred_check_branch
          %197 = sbr.rel (%p195) target = $region24
        $region23: #{tpu_custom_call.1} parent=11 // pred_region
          %p198 = scmp.lt.s32.totalorder %s24, 0
          %s199 = scalar_select %p198, %s24, 0
          %s200 = smul.addr %s199, 4
          %s201 = scalar_lea.vmem %s3, %s200
        $region24: #{tpu_custom_call.1} parent=11 // pred_fallthru
          _
        // Predicated region
        $region25: #{tpu_custom_call.1} parent=11 // pred_check
          %p202 = pneg %p146
        $region26: #{tpu_custom_call.1} parent=11 // pred_check_branch
          %204 = sbr.rel (%p202) target = $region28
        $region27: #{tpu_custom_call.1} parent=11 // pred_region
          %p205 = scmp.lt.s32.totalorder %s24, 0
          %s206 = scalar_select %p205, %s24, 0
          %s207 = scalar_lea.vmem %s4, %s206
        $region28: #{tpu_custom_call.1} parent=11 // pred_fallthru
          _
      $region12: #{tpu_custom_call.1} parent=5 // pred_fallthru
        _
      %p208 = scmp.lt.s32.totalorder %s14, 2
      // Predicated region
      $region29: #{tpu_custom_call.1} parent=5 // pred_check
        %p209 = pneg %p208
      $region30: #{tpu_custom_call.1} parent=5 // pred_check_branch
        %211 = sbr.rel (%p209) target = $region32
      $region31: #{tpu_custom_call.1} parent=5 // pred_region
        // Predicated region
        $region33: #{tpu_custom_call.1} parent=31 // pred_check
          %p212 = pneg %p46
        $region34: #{tpu_custom_call.1} parent=31 // pred_check_branch
          %214 = sbr.rel (%p212) target = $region36
        $region35: #{tpu_custom_call.1} parent=31 // pred_region
          %s215 = smul.u32 4, %s21
          %s216 = ssub.s32 6, %s215
          %p217 = scmp.lt.s32.totalorder %s216, 4
          %s218 = scalar_select %p217, %s216, 4
          %s219 = smul.u32 128, %s218
          %p220 = scmp.lt.s32.totalorder %s215, 5
          %s221 = scalar_select %p220, %s215, 5
          %s222 = smul.addr %s221, 8
          %s223 = scalar_lea.vmem %s0, %s222
          %s224 = smul.u32 4, %s21
          %s225 = ssub.s32 6, %s224
          %p226 = scmp.lt.s32.totalorder %s225, 4
          %s227 = scalar_select %p226, %s225, 4
          %s228 = smul.u32 128, %s227
        $region36: #{tpu_custom_call.1} parent=31 // pred_fallthru
          _
      $region32: #{tpu_custom_call.1} parent=5 // pred_fallthru
        _
      %p229 = scmp.le.s32.totalorder 1, %s14
      %p230 = scmp.lt.s32.totalorder %s14, 3
      %p231 = pnand %p229, %p230
      %p232 = pneg %p231
      // Predicated region
      $region37: #{tpu_custom_call.1} parent=5 // pred_check
        _
      $region38: #{tpu_custom_call.1} parent=5 // pred_check_branch
        %234 = sbr.rel (%p231) target = $region40
      $region39: #{tpu_custom_call.1} parent=5 // pred_region
        %s235 = ssub.s32 %s14, 1
        %s236 = smul.u32 4, %s23
        %s237 = ssub.s32 6, %s236
        %p238 = scmp.lt.s32.totalorder %s237, 4
        %s239 = scalar_select %p238, %s237, 4
        %s240 = smul.u32 128, %s239
        %p241 = scmp.lt.s32.totalorder %s236, 5
        %s242 = scalar_select %p241, %s236, 5
        %s243 = smul.addr %s242, 8
        %s244 = scalar_lea.vmem %s0, %s243
        %p245 = pneg %p52
        %p246 = pneg %p49
        %p247 = pneg %p73
        %p248 = pneg %p70
        %p249 = pneg %p94
        %p250 = pneg %p91
        %p251 = scmp.lt.s32.totalorder %s24, 0
        %s252 = scalar_select %p251, %s24, 0
        %s253 = smul.addr %s252, 4
        %s254 = scalar_lea.vmem %s3, %s253
        %p255 = pneg %p120
        %p256 = pneg %p117
        %p257 = scmp.lt.s32.totalorder %s24, 0
        %s258 = scalar_select %p257, %s24, 0
        %s259 = scalar_lea.vmem %s4, %s258
        %p260 = pneg %p146
        %p261 = pneg %p143
        %p262 = pneg %p174
        %p263 = pneg %p171
        %s264 = sand.u32 %s161, 1
        %s265 = scalar_lea.sflag [#allocation3], %s264
        %s266 = sand.u32 %s161, 1
        %s267 = smul.addr %s266, 32
        %s268 = scalar_lea.vmem [#allocation2], %s267
        %s269 = smul.u32 4, %s23
        %s270 = ssub.s32 6, %s269
        %p271 = scmp.lt.s32.totalorder %s270, 4
        %s272 = scalar_select %p271, %s270, 4
        %s273 = smul.u32 128, %s272
        %p274 = scmp.lt.s32.totalorder %s269, 5
        %s275 = scalar_select %p274, %s269, 5
        %s276 = smul.addr %s275, 8
        %s277 = scalar_lea.vmem %s0, %s276
        %s278 = smul.u32 4, %s23
        %s279 = ssub.s32 6, %s278
        %p280 = scmp.lt.s32.totalorder %s279, 4
        %s281 = scalar_select %p280, %s279, 4
        %s282 = smul.u32 128, %s281
        %p283 = scmp.lt.s32.totalorder %s24, 0
        %s284 = scalar_select %p283, %s24, 0
        %s285 = smul.addr %s284, 4
        %s286 = scalar_lea.vmem %s3, %s285
        %p287 = scmp.lt.s32.totalorder %s24, 0
        %s288 = scalar_select %p287, %s24, 0
        %s289 = scalar_lea.vmem %s4, %s288
        %s290 = smul.u32 4, %s23
        %s291 = ssub.s32 6, %s290
        %p292 = scmp.lt.s32.totalorder %s291, 4
        %s293 = scalar_select %p292, %s291, 4
        %s294 = smul.u32 128, %s293
        %v296 = vld [vmem:[%s277] sm:$0xff]
        %v297 = vld [vmem:[%s277 + $0x8] sm:$0xff]
        %v298 = vld [vmem:[%s277 + $0x10] sm:$0xff]
        %v299 = vld [vmem:[%s277 + $0x18] sm:$0xff]
        %v300 = vpack.c.bf16 %v297, %v296
        %v301 = vpack.c.bf16 %v299, %v298
        %v302 = vld [vmem:[%s1] sm:$0xf]
        %v303 = vld [vmem:[%s1 + $0x4] sm:$0xf]
        %v304 = vld [vmem:[%s1 + $0x8] sm:$0xf]
        %v305 = vld [vmem:[%s1 + $0xc] sm:$0xf]
        %v306 = vld [vmem:[%s2] sm:$0x1]
        %v308 = vlaneseq
        %v309 = vshrl.u32 %v308, 7
        %v310 = vsub.s32 0, %v309
        %v311 = vrot.slane %v306, %v310
        %v317 = vunpack.c.l.b16 %v302
        %v318 = vunpack.c.l.b16 %v303
        %v319 = vunpack.c.l.b16 %v304
        %v320 = vunpack.c.l.b16 %v305
        %v321 = vpack.c.b16 %v318, %v317
        %v322 = vpack.c.b16 %v320, %v319
        %vm325 = vcmask 261120
        %v327 = vsel %vm325, %v300, 0
        %v330 = vsel %vm325, %v301, 0
        %332 = vmatprep.subr.bf16.mxu0 0
        %333 = vmatpush1.bf16.msra.mxu0 0
        %334 = vmatprep.subr.bf16.mxu0 0
        %335 = vmatpush1.bf16.msra.mxu0 0
        %336 = vmatprep.subr.bf16.mxu0 0
        %337 = vmatpush1.bf16.msra.mxu0 0
        %338 = vmatprep.subr.bf16.mxu0 0
        %339 = vmatpush1.bf16.msra.mxu0 0
        %340 = vmatprep.subr.bf16.mxu0 0
        %341 = vmatpush1.bf16.msra.mxu0 0
        %342 = vmatprep.subr.bf16.mxu0 0
        %343 = vmatpush1.bf16.msra.mxu0 0
        %344 = vmatprep.subr.bf16.mxu0 0
        %345 = vmatpush1.bf16.msra.mxu0 %v322
        %346 = vmatprep.subr.bf16.mxu0 0
        %347 = vmatpush1.bf16.msra.mxu0 %v321
        %348 = vmatprep.subr.bf16.mxu0 0
        %349 = vmatpush2.bf16.msra.mxu0 0
        %350 = vmatprep.subr.bf16.mxu0 0
        %351 = vmatpush2.bf16.msra.mxu0 0
        %352 = vmatprep.subr.bf16.mxu0 0
        %353 = vmatpush2.bf16.msra.mxu0 0
        %354 = vmatprep.subr.bf16.mxu0 0
        %355 = vmatpush2.bf16.msra.mxu0 0
        %356 = vmatprep.subr.bf16.mxu0 0
        %357 = vmatpush2.bf16.msra.mxu0 0
        %358 = vmatprep.subr.bf16.mxu0 0
        %359 = vmatpush2.bf16.msra.mxu0 0
        %360 = vmatprep.subr.bf16.mxu0 0
        %361 = vmatpush2.bf16.msra.mxu0 0
        %362 = vmatprep.subr.bf16.mxu0 0
        %363 = vmatpush2.bf16.msra.mxu0 0
        %364 = vmatprep.mubr.bf16.mxu0 0
        %365 = vmatmul.mubr.bf16.gmra.mxu0 %v327
        %v366 = vpop.f32.mrf.mxu0
        %v367 = vadd.f32 %v311, %v366
        %v368 = vpop.f32.mrf.mxu0
        %v369 = vpop.f32.mrf.mxu0
        %v370 = vadd.f32 %v311, %v369
        %v371 = vpop.f32.mrf.mxu0
        %372 = vmatprep.mubr.bf16.mxu0 0
        %373 = vmatmul.mubr.bf16.gmra.mxu0 %v330
        %v374 = vpop.f32.mrf.mxu0
        %v375 = vadd.f32 %v311, %v374
        %v376 = vpop.f32.mrf.mxu0
        %v377 = vpop.f32.mrf.mxu0
        %v378 = vadd.f32 %v311, %v377
        %v379 = vpop.f32.mrf.mxu0
        %380 = vdwg.mxu0
        %v381 = vmax.f32 %v367, 0.0
        %v382 = vmax.f32 %v370, 0.0
        %v383 = vmax.f32 %v375, 0.0
        %v384 = vmax.f32 %v378, 0.0
        %v385 = vpack.c.bf16 %v382, %v381
        %v386 = vpack.c.bf16 %v384, %v383
        %v387 = vld [vmem:[%s286] sm:$0xf]
        %v388 = vld [vmem:[%s286 + $0x4] sm:$0xf]
        %v389 = vld [vmem:[%s286 + $0x8] sm:$0xf]
        %v390 = vld [vmem:[%s286 + $0xc] sm:$0xf]
        %v391 = vld [vmem:[%s286 + $0x10] sm:$0xf]
        %v392 = vld [vmem:[%s286 + $0x14] sm:$0xf]
        %v393 = vld [vmem:[%s286 + $0x18] sm:$0xf]
        %v394 = vld [vmem:[%s286 + $0x1c] sm:$0xf]
        %v395 = vld [vmem:[%s286 + $0x20] sm:$0xf]
        %v396 = vld [vmem:[%s286 + $0x24] sm:$0xf]
        %v397 = vld [vmem:[%s286 + $0x28] sm:$0xf]
        %v398 = vld [vmem:[%s286 + $0x2c] sm:$0xf]
        %v399 = vld [vmem:[%s286 + $0x30] sm:$0xf]
        %v400 = vld [vmem:[%s286 + $0x34] sm:$0xf]
        %v401 = vld [vmem:[%s286 + $0x38] sm:$0xf]
        %v402 = vld [vmem:[%s286 + $0x3c] sm:$0xf]
        %v403 = vld [vmem:[%s289] sm:$0x1]
        %v405 = vlaneseq
        %v406 = vshrl.u32 %v405, 7
        %v407 = vsub.s32 0, %v406
        %v408 = vrot.slane %v403, %v407
        %v426 = vunpack.c.l.b16 %v387
        %v427 = vunpack.c.l.b16 %v388
        %v428 = vunpack.c.l.b16 %v389
        %v429 = vunpack.c.l.b16 %v390
        %v430 = vunpack.c.l.b16 %v391
        %v431 = vunpack.c.l.b16 %v392
        %v432 = vunpack.c.l.b16 %v393
        %v433 = vunpack.c.l.b16 %v394
        %v434 = vunpack.c.l.b16 %v395
        %v435 = vunpack.c.l.b16 %v396
        %v436 = vunpack.c.l.b16 %v397
        %v437 = vunpack.c.l.b16 %v398
        %v438 = vunpack.c.l.b16 %v399
        %v439 = vunpack.c.l.b16 %v400
        %v440 = vunpack.c.l.b16 %v401
        %v441 = vunpack.c.l.b16 %v402
        %v442 = vpack.c.b16 %v427, %v426
        %v443 = vpack.c.b16 %v429, %v428
        %v444 = vpack.c.b16 %v431, %v430
        %v445 = vpack.c.b16 %v433, %v432
        %v446 = vpack.c.b16 %v435, %v434
        %v447 = vpack.c.b16 %v437, %v436
        %v448 = vpack.c.b16 %v439, %v438
        %v449 = vpack.c.b16 %v441, %v440
        %458 = vmatprep.subr.bf16.mxu0 0
        %459 = vmatpush1.bf16.msra.mxu0 %v449
        %460 = vmatprep.subr.bf16.mxu0 0
        %461 = vmatpush1.bf16.msra.mxu0 %v448
        %462 = vmatprep.subr.bf16.mxu0 0
        %463 = vmatpush1.bf16.msra.mxu0 %v447
        %464 = vmatprep.subr.bf16.mxu0 0
        %465 = vmatpush1.bf16.msra.mxu0 %v446
        %466 = vmatprep.subr.bf16.mxu0 0
        %467 = vmatpush1.bf16.msra.mxu0 %v445
        %468 = vmatprep.subr.bf16.mxu0 0
        %469 = vmatpush1.bf16.msra.mxu0 %v444
        %470 = vmatprep.subr.bf16.mxu0 0
        %471 = vmatpush1.bf16.msra.mxu0 %v443
        %472 = vmatprep.subr.bf16.mxu0 0
        %473 = vmatpush1.bf16.msra.mxu0 %v442
        %474 = vmatprep.subr.bf16.mxu0 0
        %475 = vmatpush2.bf16.msra.mxu0 0
        %476 = vmatprep.subr.bf16.mxu0 0
        %477 = vmatpush2.bf16.msra.mxu0 0
        %478 = vmatprep.subr.bf16.mxu0 0
        %479 = vmatpush2.bf16.msra.mxu0 0
        %480 = vmatprep.subr.bf16.mxu0 0
        %481 = vmatpush2.bf16.msra.mxu0 0
        %482 = vmatprep.subr.bf16.mxu0 0
        %483 = vmatpush2.bf16.msra.mxu0 0
        %484 = vmatprep.subr.bf16.mxu0 0
        %485 = vmatpush2.bf16.msra.mxu0 0
        %486 = vmatprep.subr.bf16.mxu0 0
        %487 = vmatpush2.bf16.msra.mxu0 0
        %488 = vmatprep.subr.bf16.mxu0 0
        %489 = vmatpush2.bf16.msra.mxu0 0
        %490 = vmatprep.mubr.bf16.mxu0 0
        %491 = vmatmul.mubr.bf16.gmra.mxu0 %v385
        %v492 = vpop.f32.mrf.mxu0
        %v493 = vadd.f32 %v408, %v492
        %v494 = vpop.f32.mrf.mxu0
        %v495 = vpop.f32.mrf.mxu0
        %v496 = vadd.f32 %v408, %v495
        %v497 = vpop.f32.mrf.mxu0
        %498 = vmatprep.mubr.bf16.mxu0 0
        %499 = vmatmul.mubr.bf16.gmra.mxu0 %v386
        %v500 = vpop.f32.mrf.mxu0
        %v501 = vadd.f32 %v408, %v500
        %v502 = vpop.f32.mrf.mxu0
        %v503 = vpop.f32.mrf.mxu0
        %v504 = vadd.f32 %v408, %v503
        %v505 = vpop.f32.mrf.mxu0
        %506 = vdwg.mxu0
        %507 = vst [vmem:[%s268] sm:$0xff] %v493
        %508 = vst [vmem:[%s268 + $0x8] sm:$0xff] %v496
        %509 = vst [vmem:[%s268 + $0x10] sm:$0xff] %v501
        %510 = vst [vmem:[%s268 + $0x18] sm:$0xff] %v504
        %s511 = sand.u32 %s161, 1
        %s512 = scalar_lea.sflag [#allocation3], %s511
        %s513 = sand.u32 %s161, 1
        %s514 = smul.addr %s513, 32
        %s515 = scalar_lea.vmem [#allocation2], %s514
        // Predicated region
        $region41: #{tpu_custom_call.1} parent=39 // pred_check
          %p516 = pneg %p171
        $region42: #{tpu_custom_call.1} parent=39 // pred_check_branch
          %518 = sbr.rel (%p516) target = $region44
        $region43: #{tpu_custom_call.1} parent=39 // pred_region
          %s519 = smul.u32 4, %s23
          %s520 = ssub.s32 6, %s519
          %p521 = scmp.lt.s32.totalorder %s520, 4
          %s522 = scalar_select %p521, %s520, 4
          %s523 = smul.u32 128, %s522
          %s525 = ssub.s32 512, %s523
          %526 = vsyncadd %s512, %s525
          %p527 = scmp.ne.s32.totalorder 0, %s523
          %s528 = sadd.s32 %s24, %s519
          %s529 = smul.addr %s528, 128
          %s530 = scalar_lea.hbm %s5, %s529
          %s531 = smul.u32 8, %s522
          %s532 = sshll.u32 %s515, 4
          %s533 = int_to_ptr.vmem [resolvable:$true] %s532
          %s534 = sshll.u32 %s531, 4
          %538 = dma.vmem_to_hbm [thread:$0]  (%p527), %s533, %s534, %s530, %s512, 128, 128, 8
        $region44: #{tpu_custom_call.1} parent=39 // pred_fallthru
          _
      $region40: #{tpu_custom_call.1} parent=5 // pred_fallthru
        _
      %p539 = scmp.le.s32.totalorder 2, %s14
      // Predicated region
      $region45: #{tpu_custom_call.1} parent=5 // pred_check
        %p540 = pneg %p539
      $region46: #{tpu_custom_call.1} parent=5 // pred_check_branch
        %542 = sbr.rel (%p540) target = $region48
      $region47: #{tpu_custom_call.1} parent=5 // pred_region
        %s543 = ssub.s32 %s14, 2
        // Predicated region
        $region49: #{tpu_custom_call.1} parent=47 // pred_check
          %p544 = pneg %p177
        $region50: #{tpu_custom_call.1} parent=47 // pred_check_branch
          %546 = sbr.rel (%p544) target = $region52
        $region51: #{tpu_custom_call.1} parent=47 // pred_region
          %s547 = sand.u32 %s162, 1
          %s548 = scalar_lea.sflag [#allocation3], %s547
          %s549 = sand.u32 %s162, 1
          %s550 = smul.addr %s549, 32
          %s551 = scalar_lea.vmem [#allocation2], %s550
          %552 = dma.done %s548, 512
        $region52: #{tpu_custom_call.1} parent=47 // pred_fallthru
          _
      $region48: #{tpu_custom_call.1} parent=5 // pred_fallthru
        _
    $region6: #{tpu_custom_call.1} parent=1 // loop_footer
      %s18 = sadd.s32 1, %s14
    $region7: #{tpu_custom_call.1} parent=1 // loop_footer_branch
      %13 = sbr.rel target = $region3
    $region8: #{tpu_custom_call.1} parent=1 // loop_exit
      _
    %553 = vsyncpa [#allocation3], 1
    %s554 = scalar_lea.sflag [#allocation3], 1
    %555 = vsyncpa %s554, 1

</llo_original>
